<compile_context>
chip_gen: v7x
topology: tpu7x:2x2x1
jax: 0.10.0
libtpu: 0.0.40
codegen_flags: <defaults>
</compile_context>

<pallas_src>
import math
import numpy as np
import jax
import jax.numpy as jnp
from jax import lax
from jax.experimental import pallas as pl
from jax.experimental.pallas import tpu as pltpu

_LANES = 128
_SUBLANES = 8
_MAX_PERIOD_ROWS = 1024           # resident gaussian scale tile row limit
_NATIVE_STREAM_DTYPES = (jnp.float32, jnp.bfloat16)


def _cdiv(a, b):
    return -(-a // b)


def _round_down(a, b):
    return (a // b) * b


def _plan_group(n_elems, steps_total, row_align):
    """rows-per-tile, bulk element count, pad count, tail count for a stream
    group.  Large streams -> bulk (<= n_elems, no pad) + small jnp tail.
    Tiny streams -> minimal pad up to steps_total aligned tiles."""
    rows_needed = _cdiv(n_elems, _LANES)
    rows_tile = max(row_align, _round_down(rows_needed // steps_total, row_align))
    bulk_elems = steps_total * rows_tile * _LANES
    if bulk_elems >= n_elems:
        return rows_tile, bulk_elems, bulk_elems - n_elems, 0   # pad path
    return rows_tile, bulk_elems, 0, n_elems - bulk_elems       # bulk+tail path


def _fold_bulk(arr, bulk_elems, pad_elems, pad_value):
    """Fold the first `bulk_elems` flat elements into a lane-dense [rows, 128]
    slab.  Streams stay in native dtype when f32/bf16.  Only tiny streams are
    ever padded; large streams are sliced to the aligned bulk (no full pad)."""
    flat = jnp.asarray(arr).reshape(-1)
    if flat.dtype not in _NATIVE_STREAM_DTYPES:
        flat = flat.astype(jnp.float32)
    if pad_elems > 0:
        flat = jnp.pad(flat, (0, pad_elems), constant_values=pad_value)
    elif bulk_elems < flat.shape[0]:
        flat = flat[:bulk_elems]
    return flat.reshape(bulk_elems // _LANES, _LANES)


def _flat_tail(arr, bulk_elems):
    flat = jnp.asarray(arr).reshape(-1)
    return flat[bulk_elems:].astype(jnp.float32)


def _make_elbo_kernel(*, observation_model, version, alpha, scale_mode,
                      scale_rows):
    """Kernel body factory; all config closed over as Python constants.
    scale_mode: None (poisson) | 'resident' | 'streamed' (gaussian)."""

    def kernel(*refs):
        it = iter(refs)
        x_ref = next(it)
        fr_ref = next(it)
        scale_ref = next(it) if scale_mode is not None else None
        pm_ref = next(it)
        plv_ref = next(it)
        lm_ref = next(it)
        llv_ref = next(it)
        if version == 2:
            em_ref = next(it)
            elv_ref = next(it)
        o_ref = next(it)
        accx_ref = next(it)
        accz_ref = next(it)

        i = pl.program_id(1)                      # inner "arbitrary" step axis

        @pl.when(i == 0)
        def _init():
            accx_ref[...] = jnp.zeros_like(accx_ref)
            accz_ref[...] = jnp.zeros_like(accz_ref)

        # ------------- observation log-likelihood (elementwise) -------------
        x = x_ref[...].astype(jnp.float32)
        fr = fr_ref[...].astype(jnp.float32)
        if observation_model == "poisson":
            # Padded elements (fr=1, x=0) contribute exactly +1.0 each; the
            # wrapper subtracts the pad count (no per-step iota mask).
            obs = fr - x * jnp.log(fr)
        else:
            d2 = jnp.square(fr - x)       # zero pads -> exact 0 contribution
            if scale_mode == "resident":
                # Tiny resident (scale_rows,128) tile covering one full period
                # of the flat lane/feature pattern; vreg-aligned reshape keeps
                # the broadcast on-chip (no per-element HBM scale stream).
                scale = scale_ref[...].astype(jnp.float32)
                obs = d2.reshape(-1, scale_rows, _LANES) * scale[None]
            else:
                obs = d2 * scale_ref[...].astype(jnp.float32)
        accx_ref[...] += jnp.sum(obs.reshape(-1, _SUBLANES, _LANES), axis=0)

        # ------------------- KL terms (zero pads -> exact 0) ----------------
        pm = pm_ref[...].astype(jnp.float32)
        plv = plv_ref[...].astype(jnp.float32)
        lm = lm_ref[...].astype(jnp.float32)
        llv = llv_ref[...].astype(jnp.float32)
        inv_lvar = jnp.exp(-llv)             # hoisted, shared by both KL terms
        sq_p = jnp.square(pm - lm)
        if version == 1:
            kl = 1.0 + plv - llv - (sq_p + jnp.exp(plv)) * inv_lvar
        else:
            em = em_ref[...].astype(jnp.float32)
            elv = elv_ref[...].astype(jnp.float32)
            sq_e = jnp.square(em - lm)
            kl = ((1.0 - llv) + alpha * elv + (1.0 - alpha) * plv
                  - inv_lvar * (alpha * (sq_e + jnp.exp(elv))
                                + (1.0 - alpha) * (sq_p + jnp.exp(plv))))
        accz_ref[...] += jnp.sum(kl.reshape(-1, _SUBLANES, _LANES), axis=0)

        # ---- per-core partial sum, written once on this core's last step ---
        @pl.when(i == pl.num_programs(1) - 1)
        def _fin():
            total = jnp.sum(accx_ref[...]) - 0.5 * jnp.sum(accz_ref[...])
            o_ref[...] = jnp.full((1, _SUBLANES, _LANES), total, jnp.float32)

    return kernel


def elbo_loss(x, posterior_firing_rate, posterior_mean, posterior_log_variance,
              label_mean, label_log_variance, encoder_mean=None,
              encoder_log_variance=None, noise_weight=None, *,
              version: int = 2, alpha: float = 0.5,
              observation_model: str = "poisson",
              target_tile_bytes: int = 8 * 1024 * 1024):
    """pi-VAE ELBOLoss.forward as a Pallas TPU kernel.  Returns a 0-d f32."""
    if version not in (1, 2):
        raise ValueError("Invalid loss version.")
    if version == 2 and not (0.0 <= alpha <= 1.0):
        raise ValueError("Alpha outside of allowed interval [0, 1].")
    if observation_model not in ("poisson", "gaussian"):
        raise ValueError(f"Invalid observation_model: {observation_model}")

    n_samples, x_dim = x.shape
    z_dim = posterior_mean.shape[-1]
    n_x_elems = n_samples * x_dim
    n_z_elems = n_samples * z_dim

    gaussian = observation_model == "gaussian"
    scale_mode = None
    row_align_x = _SUBLANES
    if gaussian:
        if noise_weight is None:
            raise ValueError("gaussian observation model needs noise_weight")
        # observation_noise_model(ones(1,1)) == weight.reshape(1, x_dim)
        olv = jnp.asarray(noise_weight, jnp.float32).reshape(1, x_dim)
        inv2v = (0.5 * jnp.exp(-olv)).reshape(-1)          # (x_dim,)
        # flat element f maps to feature f % x_dim; the (row, lane) pattern
        # repeats every P rows -> resident (lcm(P,8),128) scale tile.
        period = x_dim // math.gcd(x_dim, _LANES)
        scale_rows = period * _SUBLANES // math.gcd(period, _SUBLANES)
        if scale_rows <= _MAX_PERIOD_ROWS:
            scale_mode = "resident"
            row_align_x = scale_rows
        else:
            # TODO(synk): pathological x_dim (huge & coprime with 128): fall
            # back to streaming a pre-broadcast scale slab (extra HBM stream).
            scale_mode = "streamed"

    n_x_streams = 2 + (1 if scale_mode == "streamed" else 0)
    n_z_streams = 6 if version == 2 else 4

    # ---- grid: leading 2-way "parallel" core axis x inner step axis --------
    total_bytes = 4 * (n_x_streams * n_x_elems + n_z_streams * n_z_elems)
    inner_steps = max(1, _cdiv(total_bytes, 2 * target_tile_bytes))
    steps_total = 2 * inner_steps

    rows_x, bulk_x, pad_x, tail_x = _plan_group(n_x_elems, steps_total, row_align_x)
    rows_z, bulk_z, pad_z, tail_z = _plan_group(n_z_elems, steps_total, _SUBLANES)

    # ---- fold the tile-aligned bulk of every stream ------------------------
    pad_fr = 1.0 if observation_model == "poisson" else 0.0
    x_f = _fold_bulk(x, bulk_x, pad_x, 0.0)
    fr_f = _fold_bulk(posterior_firing_rate, bulk_x, pad_x, pad_fr)

    z_tensors = (posterior_mean, posterior_log_variance,
                 label_mean, label_log_variance)
    if version == 2:
        z_tensors = z_tensors + (encoder_mean, encoder_log_variance)
    z_folded = [_fold_bulk(t, bulk_z, pad_z, 0.0) for t in z_tensors]

    x_spec = pl.BlockSpec((rows_x, _LANES), lambda c, i: (c * inner_steps + i, 0))
    z_spec = pl.BlockSpec((rows_z, _LANES), lambda c, i: (c * inner_steps + i, 0))

    args = [x_f, fr_f]
    in_specs = [x_spec, x_spec]
    if scale_mode == "resident":
        lane_feat = jnp.arange(row_align_x * _LANES, dtype=jnp.int32) % x_dim
        scale_tile = inv2v[lane_feat].reshape(row_align_x, _LANES)
        args.append(scale_tile)
        in_specs.append(pl.BlockSpec((row_align_x, _LANES), lambda c, i: (0, 0)))
    elif scale_mode == "streamed":
        slab = jnp.broadcast_to(inv2v.reshape(1, x_dim), (n_samples, x_dim))
        args.append(_fold_bulk(slab, bulk_x, pad_x, 0.0))
        in_specs.append(x_spec)
    args += z_folded
    in_specs += [z_spec] * len(z_folded)

    kernel = _make_elbo_kernel(
        observation_model=observation_model, version=version,
        alpha=float(alpha), scale_mode=scale_mode,
        scale_rows=row_align_x if scale_mode == "resident" else 0)

    bytes_streamed = sum(int(np.prod(a.shape)) * a.dtype.itemsize for a in args)
    n_trans = ((bulk_x if observation_model == "poisson" else 0)
               + (3 if version == 2 else 2) * bulk_z)
    cost = pl.CostEstimate(flops=int(4 * bulk_x + 16 * bulk_z),
                           transcendentals=int(n_trans),
                           bytes_accessed=int(bytes_streamed + 8 * 1024))

    # Explicit scoped-VMEM limit: ~2x step budget (double buffering) + slack;
    # fits the default/physical VMEM on v5e, v6e and v7x.
    vmem_limit = int(min(48 << 20, max(32 << 20, 3 * target_tile_bytes)))

    partials = pl.pallas_call(
        kernel,
        out_shape=jax.ShapeDtypeStruct((2, _SUBLANES, _LANES), jnp.float32),
        grid_spec=pltpu.PrefetchScalarGridSpec(
            num_scalar_prefetch=0,
            grid=(2, inner_steps),
            in_specs=in_specs,
            out_specs=pl.BlockSpec((1, _SUBLANES, _LANES),
                                   lambda c, i: (c, 0, 0)),
            scratch_shapes=[pltpu.VMEM((_SUBLANES, _LANES), jnp.float32),
                            pltpu.VMEM((_SUBLANES, _LANES), jnp.float32)]),
        compiler_params=pltpu.CompilerParams(
            dimension_semantics=("parallel", "arbitrary"),
            vmem_limit_bytes=vmem_limit),
        cost_estimate=cost,
    )(*args)

    total = partials[0, 0, 0] + partials[1, 0, 0]

    # ---- ragged tails (< one tile per stream group) reduced in plain jnp ---
    if tail_x > 0:
        xt = _flat_tail(x, bulk_x)
        frt = _flat_tail(posterior_firing_rate, bulk_x)
        if observation_model == "poisson":
            total = total + jnp.sum(frt - xt * jnp.log(frt))
        else:
            feat = (jnp.arange(tail_x, dtype=jnp.int32)
                    + (bulk_x % x_dim)) % x_dim
            total = total + jnp.sum(jnp.square(frt - xt) * inv2v[feat])
    if tail_z > 0:
        pmt = _flat_tail(posterior_mean, bulk_z)
        plvt = _flat_tail(posterior_log_variance, bulk_z)
        lmt = _flat_tail(label_mean, bulk_z)
        llvt = _flat_tail(label_log_variance, bulk_z)
        inv_lvar_t = jnp.exp(-llvt)
        kl_post_t = (1.0 + plvt - llvt
                     - (jnp.square(pmt - lmt) + jnp.exp(plvt)) * inv_lvar_t)
        if version == 1:
            kl_t = kl_post_t
        else:
            emt = _flat_tail(encoder_mean, bulk_z)
            elvt = _flat_tail(encoder_log_variance, bulk_z)
            kl_enc_t = (1.0 + elvt - llvt
                        - (jnp.square(emt - lmt) + jnp.exp(elvt)) * inv_lvar_t)
            kl_t = alpha * kl_enc_t + (1.0 - alpha) * kl_post_t
        total = total - 0.5 * jnp.sum(kl_t)

    # Poisson pad elements (fr=1, x=0) each contribute exactly +1.0.
    if observation_model == "poisson" and pad_x > 0:
        total = total - float(pad_x)

    loss = total / float(n_samples)
    if gaussian:
        # constant 0.5 * sum_d(olv_d) term of the gaussian log-likelihood
        loss = loss + 0.5 * jnp.sum(olv)
    return loss


# -----------------------------------------------------------------------------
# Pure-JAX reference (mirrors the PyTorch module exactly)
# -----------------------------------------------------------------------------
def _elbo_reference(x, fr, pm, plv, lm, llv, em=None, elv=None, *, version=2,
                    alpha=0.5, observation_model="poisson", noise_weight=None):
    def kl(m0, lv0, m1, lv1):
        return jnp.sum(1.0 + lv0 - lv1
                       - (jnp.square(m0 - m1) + jnp.exp(lv0)) / jnp.exp(lv1),
                       axis=-1)

    if observation_model == "poisson":
        obs = jnp.sum(fr - x * jnp.log(fr), axis=-1)
    else:
        olv = jnp.ones((1, 1), jnp.float32) @ noise_weight.T
        obs = jnp.sum(jnp.square(fr - x) / (2.0 * jnp.exp(olv)) + olv / 2.0,
                      axis=-1)
    if version == 1:
        kl_loss = 0.5 * kl(pm, plv, lm, llv)
    else:
        kl_loss = (alpha * (0.5 * kl(em, elv, lm, llv))
                   + (1.0 - alpha) * (0.5 * kl(pm, plv, lm, llv)))
    return jnp.mean(obs - kl_loss)


# -----------------------------------------------------------------------------
if __name__ == "__main__":
    def make_inputs(key, n_samples, x_dim, z_dim):
        ks = jax.random.split(key, 9)
        x = jax.random.poisson(ks[0], 3.0, (n_samples, x_dim)).astype(jnp.float32)
        fr = jax.nn.softplus(jax.random.normal(ks[1], (n_samples, x_dim))) + 0.1
        pm = jax.random.normal(ks[2], (n_samples, z_dim))
        plv = 0.1 * jax.random.normal(ks[3], (n_samples, z_dim))
        lm = jax.random.normal(ks[4], (n_samples, z_dim))
        llv = 0.1 * jax.random.normal(ks[5], (n_samples, z_dim))
        em = jax.random.normal(ks[6], (n_samples, z_dim))
        elv = 0.1 * jax.random.normal(ks[7], (n_samples, z_dim))
        w = 0.05 * jax.random.normal(ks[8], (x_dim, 1))
        return x, fr, pm, plv, lm, llv, em, elv, w

    configs = [
        # (n_samples, x_dim, z_dim, target_tile_bytes)
        (50, 16, 4, 8 * 1024 * 1024),   # tiny -> pad path, single step/core
        (640, 16, 4, 64 * 1024),        # multi-step grid -> bulk + jnp tail
        (40, 24, 5, 8 * 1024 * 1024),   # x_dim !| 128 -> gaussian period tile
    ]

    key = jax.random.PRNGKey(0)
    for (n, xd, zd, tgt) in configs:
        key, sub = jax.random.split(key)
        x, fr, pm, plv, lm, llv, em, elv, w = make_inputs(sub, n, xd, zd)
        for obs_model in ("poisson", "gaussian"):
            for version in (1, 2):
                got = elbo_loss(
                    x, fr, pm, plv, lm, llv,
                    encoder_mean=em if version == 2 else None,
                    encoder_log_variance=elv if version == 2 else None,
                    noise_weight=w if obs_model == "gaussian" else None,
                    version=version, alpha=0.5,
                    observation_model=obs_model,
                    target_tile_bytes=tgt)
                got = jax.block_until_ready(got)
                want = _elbo_reference(
                    x, fr, pm, plv, lm, llv, em, elv, version=version,
                    alpha=0.5, observation_model=obs_model, noise_weight=w)
                # tolerance accounts for f32 reduction-order differences
                assert np.allclose(np.asarray(got), np.asarray(want),
                                   rtol=1e-3, atol=1e-3), \
                    (n, xd, zd, obs_model, version,
                     float(got), float(np.asarray(want)))

    print("KERNEL_OK")
</pallas_src>

<mosaic_0001>
module attributes {stable_mosaic.version = 11 : i64} {
  func.func @kernel(%arg0: i32, %arg1: i32, %arg2: memref<8x128xf32, #tpu.memory_space<vmem>>, %arg3: memref<8x128xf32, #tpu.memory_space<vmem>>, %arg4: memref<8x128xf32, #tpu.memory_space<vmem>>, %arg5: memref<8x128xf32, #tpu.memory_space<vmem>>, %arg6: memref<8x128xf32, #tpu.memory_space<vmem>>, %arg7: memref<8x128xf32, #tpu.memory_space<vmem>>, %arg8: memref<1x8x128xf32, #tpu.memory_space<vmem>>, %arg9: memref<8x128xf32, #tpu.memory_space<vmem>>, %arg10: memref<8x128xf32, #tpu.memory_space<vmem>>) attributes {dimension_semantics = [#tpu.dimension_semantics<parallel>, #tpu.dimension_semantics<arbitrary>], iteration_bounds = array<i64: 2, 1>, scalar_prefetch = 0 : i64, scratch_operands = 2 : i64, tpu.core_type = #tpu.core_type<tc>, window_params = [{transform_indices = @transform_0, window_bounds = array<i64: 8, 128>}, {transform_indices = @transform_1, window_bounds = array<i64: 8, 128>}, {transform_indices = @transform_2, window_bounds = array<i64: 8, 128>}, {transform_indices = @transform_3, window_bounds = array<i64: 8, 128>}, {transform_indices = @transform_4, window_bounds = array<i64: 8, 128>}, {transform_indices = @transform_5, window_bounds = array<i64: 8, 128>}, {transform_indices = @transform_6, window_bounds = array<i64: 1, 8, 128>}]} {
    %c0_i32 = arith.constant 0 : i32
    %0 = arith.cmpi eq, %arg1, %c0_i32 : i32
    %1 = arith.extui %0 : i1 to i32
    %c0_i32_0 = arith.constant 0 : i32
    %2 = arith.cmpi ne, %1, %c0_i32_0 : i32
    scf.if %2 {
      %cst_25 = arith.constant 0.000000e+00 : f32
      %37 = vector.broadcast %cst_25 : f32 to vector<8x128xf32>
      %c0_26 = arith.constant 0 : index
      %c0_27 = arith.constant 0 : index
      %38 = vector.load %arg9[%c0_26, %c0_27] : memref<8x128xf32, #tpu.memory_space<vmem>>, vector<8x128xf32>
      tpu.vector_store %arg9[%c0_26, %c0_27], %37 {strides = array<i32>} : memref<8x128xf32, #tpu.memory_space<vmem>>, vector<8x128xf32>,
      %cst_28 = arith.constant 0.000000e+00 : f32
      %39 = vector.broadcast %cst_28 : f32 to vector<8x128xf32>
      %c0_29 = arith.constant 0 : index
      %c0_30 = arith.constant 0 : index
      %40 = vector.load %arg10[%c0_29, %c0_30] : memref<8x128xf32, #tpu.memory_space<vmem>>, vector<8x128xf32>
      tpu.vector_store %arg10[%c0_29, %c0_30], %39 {strides = array<i32>} : memref<8x128xf32, #tpu.memory_space<vmem>>, vector<8x128xf32>,
    } else {
    }
    %c0 = arith.constant 0 : index
    %c0_1 = arith.constant 0 : index
    %3 = vector.load %arg2[%c0, %c0_1] : memref<8x128xf32, #tpu.memory_space<vmem>>, vector<8x128xf32>
    %c0_2 = arith.constant 0 : index
    %c0_3 = arith.constant 0 : index
    %4 = vector.load %arg3[%c0_2, %c0_3] : memref<8x128xf32, #tpu.memory_space<vmem>>, vector<8x128xf32>
    %5 = math.log %4 : vector<8x128xf32>
    %6 = arith.mulf %3, %5 : vector<8x128xf32>
    %7 = arith.subf %4, %6 : vector<8x128xf32>
    %c0_4 = arith.constant 0 : index
    %c0_5 = arith.constant 0 : index
    %8 = vector.load %arg9[%c0_4, %c0_5] : memref<8x128xf32, #tpu.memory_space<vmem>>, vector<8x128xf32>
    %9 = vector.shape_cast %7 : vector<8x128xf32> to vector<1x8x128xf32>
    %cst = arith.constant dense<0.000000e+00> : vector<8x128xf32>
    %10 = vector.multi_reduction <add>, %9, %cst [0] : vector<1x8x128xf32> to vector<8x128xf32>
    %11 = arith.addf %8, %10 : vector<8x128xf32>
    %c0_6 = arith.constant 0 : index
    %c0_7 = arith.constant 0 : index
    %12 = vector.load %arg9[%c0_6, %c0_7] : memref<8x128xf32, #tpu.memory_space<vmem>>, vector<8x128xf32>
    tpu.vector_store %arg9[%c0_6, %c0_7], %11 {strides = array<i32>} : memref<8x128xf32, #tpu.memory_space<vmem>>, vector<8x128xf32>,
    %c0_8 = arith.constant 0 : index
    %c0_9 = arith.constant 0 : index
    %13 = vector.load %arg4[%c0_8, %c0_9] : memref<8x128xf32, #tpu.memory_space<vmem>>, vector<8x128xf32>
    %c0_10 = arith.constant 0 : index
    %c0_11 = arith.constant 0 : index
    %14 = vector.load %arg5[%c0_10, %c0_11] : memref<8x128xf32, #tpu.memory_space<vmem>>, vector<8x128xf32>
    %c0_12 = arith.constant 0 : index
    %c0_13 = arith.constant 0 : index
    %15 = vector.load %arg6[%c0_12, %c0_13] : memref<8x128xf32, #tpu.memory_space<vmem>>, vector<8x128xf32>
    %c0_14 = arith.constant 0 : index
    %c0_15 = arith.constant 0 : index
    %16 = vector.load %arg7[%c0_14, %c0_15] : memref<8x128xf32, #tpu.memory_space<vmem>>, vector<8x128xf32>
    %cst_16 = arith.constant 0.000000e+00 : f32
    %17 = vector.broadcast %cst_16 : f32 to vector<8x128xf32>
    %18 = arith.subf %17, %16 : vector<8x128xf32>
    %19 = math.exp %18 : vector<8x128xf32>
    %20 = arith.subf %13, %15 : vector<8x128xf32>
    %21 = arith.mulf %20, %20 : vector<8x128xf32>
    %cst_17 = arith.constant 1.000000e+00 : f32
    %22 = vector.broadcast %cst_17 : f32 to vector<8x128xf32>
    %23 = arith.addf %22, %14 : vector<8x128xf32>
    %24 = arith.subf %23, %16 : vector<8x128xf32>
    %25 = math.exp %14 : vector<8x128xf32>
    %26 = arith.addf %21, %25 : vector<8x128xf32>
    %27 = arith.mulf %26, %19 : vector<8x128xf32>
    %28 = arith.subf %24, %27 : vector<8x128xf32>
    %c0_18 = arith.constant 0 : index
    %c0_19 = arith.constant 0 : index
    %29 = vector.load %arg10[%c0_18, %c0_19] : memref<8x128xf32, #tpu.memory_space<vmem>>, vector<8x128xf32>
    %30 = vector.shape_cast %28 : vector<8x128xf32> to vector<1x8x128xf32>
    %cst_20 = arith.constant dense<0.000000e+00> : vector<8x128xf32>
    %31 = vector.multi_reduction <add>, %30, %cst_20 [0] : vector<1x8x128xf32> to vector<8x128xf32>
    %32 = arith.addf %29, %31 : vector<8x128xf32>
    %c0_21 = arith.constant 0 : index
    %c0_22 = arith.constant 0 : index
    %33 = vector.load %arg10[%c0_21, %c0_22] : memref<8x128xf32, #tpu.memory_space<vmem>>, vector<8x128xf32>
    tpu.vector_store %arg10[%c0_21, %c0_22], %32 {strides = array<i32>} : memref<8x128xf32, #tpu.memory_space<vmem>>, vector<8x128xf32>,
    %c0_i32_23 = arith.constant 0 : i32
    %34 = arith.cmpi eq, %arg1, %c0_i32_23 : i32
    %35 = arith.extui %34 : i1 to i32
    %c0_i32_24 = arith.constant 0 : i32
    %36 = arith.cmpi ne, %35, %c0_i32_24 : i32
    scf.if %36 {
      %c0_25 = arith.constant 0 : index
      %c0_26 = arith.constant 0 : index
      %37 = vector.load %arg9[%c0_25, %c0_26] : memref<8x128xf32, #tpu.memory_space<vmem>>, vector<8x128xf32>
      %38 = vector.shape_cast %37 : vector<8x128xf32> to vector<1x8x128xf32>
      %cst_27 = arith.constant dense<0.000000e+00> : vector<1xf32>
      %39 = vector.multi_reduction <add>, %38, %cst_27 [1, 2] : vector<1x8x128xf32> to vector<1xf32>
      %40 = vector.shape_cast %39 : vector<1xf32> to vector<1x1x1xf32>
      %41 = vector.extract %40[0, 0, 0] : f32 from vector<1x1x1xf32>
      %c0_28 = arith.constant 0 : index
      %c0_29 = arith.constant 0 : index
      %42 = vector.load %arg10[%c0_28, %c0_29] : memref<8x128xf32, #tpu.memory_space<vmem>>, vector<8x128xf32>
      %43 = vector.shape_cast %42 : vector<8x128xf32> to vector<1x8x128xf32>
      %cst_30 = arith.constant dense<0.000000e+00> : vector<1xf32>
      %44 = vector.multi_reduction <add>, %43, %cst_30 [1, 2] : vector<1x8x128xf32> to vector<1xf32>
      %45 = vector.shape_cast %44 : vector<1xf32> to vector<1x1x1xf32>
      %46 = vector.extract %45[0, 0, 0] : f32 from vector<1x1x1xf32>
      %cst_31 = arith.constant 5.000000e-01 : f32
      %47 = arith.mulf %cst_31, %46 : f32
      %48 = arith.subf %41, %47 : f32
      %49 = vector.broadcast %48 : f32 to vector<1x8x128xf32>
      %c0_32 = arith.constant 0 : index
      %c0_33 = arith.constant 0 : index
      %c0_34 = arith.constant 0 : index
      %50 = vector.load %arg8[%c0_32, %c0_33, %c0_34] : memref<1x8x128xf32, #tpu.memory_space<vmem>>, vector<1x8x128xf32>
      tpu.vector_store %arg8[%c0_32, %c0_33, %c0_34], %49 {strides = array<i32>} : memref<1x8x128xf32, #tpu.memory_space<vmem>>, vector<1x8x128xf32>,
    } else {
    }
    return
  }
  func.func @transform_0(%arg0: i32, %arg1: i32) -> (i32, i32) {
    %c1_i32 = arith.constant 1 : i32
    %0 = arith.muli %arg0, %c1_i32 : i32
    %1 = arith.addi %0, %arg1 : i32
    %c0_i32 = arith.constant 0 : i32
    %c0_i32_0 = arith.constant 0 : i32
    return %1, %c0_i32 : i32, i32
  }
  func.func @transform_1(%arg0: i32, %arg1: i32) -> (i32, i32) {
    %c1_i32 = arith.constant 1 : i32
    %0 = arith.muli %arg0, %c1_i32 : i32
    %1 = arith.addi %0, %arg1 : i32
    %c0_i32 = arith.constant 0 : i32
    %c0_i32_0 = arith.constant 0 : i32
    return %1, %c0_i32 : i32, i32
  }
  func.func @transform_2(%arg0: i32, %arg1: i32) -> (i32, i32) {
    %c1_i32 = arith.constant 1 : i32
    %0 = arith.muli %arg0, %c1_i32 : i32
    %1 = arith.addi %0, %arg1 : i32
    %c0_i32 = arith.constant 0 : i32
    %c0_i32_0 = arith.constant 0 : i32
    return %1, %c0_i32 : i32, i32
  }
  func.func @transform_3(%arg0: i32, %arg1: i32) -> (i32, i32) {
    %c1_i32 = arith.constant 1 : i32
    %0 = arith.muli %arg0, %c1_i32 : i32
    %1 = arith.addi %0, %arg1 : i32
    %c0_i32 = arith.constant 0 : i32
    %c0_i32_0 = arith.constant 0 : i32
    return %1, %c0_i32 : i32, i32
  }
  func.func @transform_4(%arg0: i32, %arg1: i32) -> (i32, i32) {
    %c1_i32 = arith.constant 1 : i32
    %0 = arith.muli %arg0, %c1_i32 : i32
    %1 = arith.addi %0, %arg1 : i32
    %c0_i32 = arith.constant 0 : i32
    %c0_i32_0 = arith.constant 0 : i32
    return %1, %c0_i32 : i32, i32
  }
  func.func @transform_5(%arg0: i32, %arg1: i32) -> (i32, i32) {
    %c1_i32 = arith.constant 1 : i32
    %0 = arith.muli %arg0, %c1_i32 : i32
    %1 = arith.addi %0, %arg1 : i32
    %c0_i32 = arith.constant 0 : i32
    %c0_i32_0 = arith.constant 0 : i32
    return %1, %c0_i32 : i32, i32
  }
  func.func @transform_6(%arg0: i32, %arg1: i32) -> (i32, i32, i32) {
    %c0_i32 = arith.constant 0 : i32
    %c0_i32_0 = arith.constant 0 : i32
    %c0_i32_1 = arith.constant 0 : i32
    return %arg0, %c0_i32, %c0_i32_0 : i32, i32, i32
  }
}

</mosaic_0001>

<llo_original>
// kernel: tpu_custom_call.1
$region0: #{tpu_custom_call.1}
  #allocation0 [shape = 'u32[]', space=smem, size = 0x4, offset = 0x4, fixed_abs, tag = 'smem constant byte address 0x4 - core index']
  #allocation1 [shape = 'u32[144,128]{1,0:T(1,128)}', space=vmem, size = 0x12000, scoped, tag = 'internal scratch']
  #allocation2 [shape = 'f32[8,128]{1,0:T(8,128)}', space=vmem, size = 0x1000, scoped, tag = 'scratch operand']
  #allocation3 [shape = 'f32[8,128]{1,0:T(8,128)}', space=vmem, size = 0x1000, scoped, tag = 'scratch operand']
  %s0 = inlined_call_operand.hbm [shape: f32[16,128], index: 0, kind: input, shape index: {}]
  %s1 = inlined_call_operand.hbm [shape: f32[16,128], index: 1, kind: input, shape index: {}]
  %s2 = inlined_call_operand.hbm [shape: f32[16,128], index: 2, kind: input, shape index: {}]
  %s3 = inlined_call_operand.hbm [shape: f32[16,128], index: 3, kind: input, shape index: {}]
  %s4 = inlined_call_operand.hbm [shape: f32[16,128], index: 4, kind: input, shape index: {}]
  %s5 = inlined_call_operand.vmem [shape: f32[16,128], index: 5, kind: input, shape index: {}]
  %s6 = inlined_call_operand.hbm [shape: f32[2,8,128], index: 6, kind: output, shape index: {}]
  %s7 = sld [smem:[#allocation0]]
  $region85: #{tpu_custom_call.1} parent=0
    _
  %s9 = ssub.s32 1, %s7
  %s10 = scalar_select 0, %s9, %s7
  $region1: #{tpu_custom_call.1} parent=0
    #allocation4 [shape = 'u8[8192]{0}', space=vmem, size = 0x2000, scoped, tag = 'input window, operand 0']
    #allocation5 [shape = 's32[2]{0}', space=sflag, size = 0x8, scoped, tag = 'scoped memory for tpu_custom_call.1']
    #allocation6 [shape = 's32[2]{0}', space=sflag, size = 0x8, scoped, tag = 'scoped memory for tpu_custom_call.1']
    #allocation7 [shape = 'u8[8192]{0}', space=vmem, size = 0x2000, scoped, tag = 'input window, operand 1']
    #allocation8 [shape = 's32[2]{0}', space=sflag, size = 0x8, scoped, tag = 'scoped memory for tpu_custom_call.1']
    #allocation9 [shape = 'u8[8192]{0}', space=vmem, size = 0x2000, scoped, tag = 'input window, operand 2']
    #allocation10 [shape = 'u8[8192]{0}', space=vmem, size = 0x2000, scoped, tag = 'input window, operand 3']
    #allocation11 [shape = 's32[2]{0}', space=sflag, size = 0x8, scoped, tag = 'scoped memory for tpu_custom_call.1']
    #allocation12 [shape = 'u8[8192]{0}', space=vmem, size = 0x2000, scoped, tag = 'input window, operand 4']
    #allocation13 [shape = 'u8[8192]{0}', space=vmem, size = 0x2000, scoped, tag = 'output window, operand 0']
    %11 = vsyncpa [#allocation5], 0
    %s12 = scalar_lea.sflag [#allocation5], 1
    %13 = vsyncpa %s12, 0
    %14 = vsyncpa [#allocation8], 0
    %s15 = scalar_lea.sflag [#allocation8], 1
    %16 = vsyncpa %s15, 0
    %17 = vsyncpa [#allocation11], 0
    %s18 = scalar_lea.sflag [#allocation11], 1
    %19 = vsyncpa %s18, 0
    %20 = vsyncpa [#allocation6], 0
    %s21 = scalar_lea.sflag [#allocation6], 1
    %22 = vsyncpa %s21, 0
    loop: start=0, step=1, limit=4
    $region2: #{tpu_custom_call.1} parent=1 // loop_pre_header
      _
    $region3: #{tpu_custom_call.1} parent=1 // loop_header
      %s24 = sphi 0, %s28
      %p25 = scmp.ge.s32.totalorder %s24, 4
      %s31 = sphi 0, %s43
      %s32 = sphi 0, %s39
      %s33 = sphi 0, %s31
      %s34 = sphi 0, %s32
      %s35 = sphi 0, %s33
      %s36 = sphi 0, %s34
      %s48 = sphi 0, %s50
      %s51 = sphi 0, %s48
      %s52 = sphi 0, %s51
      %s68 = sphi 0, %s52
      %s76 = sphi 0, %s78
      %s79 = sphi 0, %s76
      %s80 = sphi 0, %s79
      %s96 = sphi 0, %s80
      %s104 = sphi 0, %s106
      %s107 = sphi 0, %s104
      %s108 = sphi 0, %s107
      %s124 = sphi 0, %s108
      %s132 = sphi 0, %s134
      %s135 = sphi 0, %s132
      %s136 = sphi 0, %s135
      %s152 = sphi 0, %s136
      %s160 = sphi 0, %s162
      %s163 = sphi 0, %s160
      %s164 = sphi 0, %s163
      %s180 = sphi 0, %s164
      %s188 = sphi 0, %s190
      %s191 = sphi 0, %s188
      %s192 = sphi 0, %s191
      %s208 = sphi 0, %s192
      %s214 = sphi 0, %s216
      %s217 = sphi 0, %s214
      %s218 = sphi 0, %s217
      %s234 = sphi 0, %s218
    $region4: #{tpu_custom_call.1} parent=1 // loop_header_branch
      %27 = sbr.rel (%p25) target = $region8
    $region5: #{tpu_custom_call.1} parent=1 // loop_body
      %s29 = ssub.s32 %s24, 1
      %s30 = ssub.s32 %s24, 2
      %s37 = sadd.s32 1, %s32
      %p38 = scmp.ge.s32.totalorder %s37, 1
      %s39 = scalar_select %p38, 0, %s37
      %s40 = sadd.s32 1, %s31
      %s41 = scalar_select %p38, %s40, %s31
      %p42 = scmp.ge.s32.totalorder %s41, 2
      %s43 = scalar_select %p42, 0, %s41
      %s44 = sadd.s32 %s31, %s32
      %s45 = sadd.s32 %s43, %s39
      %s46 = ssub.s32 %s44, %s45
      %p47 = scmp.eq.s32.totalorder %s46, 0
      %s49 = sadd.s32 %s48, 1
      %s50 = scalar_select %p47, %s48, %s49
      %p53 = pneg %p47
      %p54 = scmp.eq.s32.totalorder %s24, 1
      %p55 = por %p53, %p54
      %p56 = scmp.ne.s32.totalorder %s48, %s51
      %p57 = scmp.eq.s32.totalorder %s24, 0
      %p58 = por %p56, %p57
      %p59 = scmp.ne.s32.totalorder %s48, %s51
      %p60 = scmp.eq.s32.totalorder %s29, 1
      %p61 = por %p59, %p60
      %p62 = scmp.ne.s32.totalorder %s51, %s52
      %p63 = scmp.eq.s32.totalorder %s29, 0
      %p64 = por %p62, %p63
      %p65 = scmp.ne.s32.totalorder %s51, %s52
      %p66 = scmp.eq.s32.totalorder %s30, 1
      %p67 = por %p65, %p66
      %p69 = scmp.ne.s32.totalorder %s52, %s68
      %p70 = scmp.eq.s32.totalorder %s30, 0
      %p71 = por %p69, %p70
      %s72 = sadd.s32 %s31, %s32
      %s73 = sadd.s32 %s43, %s39
      %s74 = ssub.s32 %s72, %s73
      %p75 = scmp.eq.s32.totalorder %s74, 0
      %s77 = sadd.s32 %s76, 1
      %s78 = scalar_select %p75, %s76, %s77
      %p81 = pneg %p75
      %p82 = scmp.eq.s32.totalorder %s24, 1
      %p83 = por %p81, %p82
      %p84 = scmp.ne.s32.totalorder %s76, %s79
      %p85 = scmp.eq.s32.totalorder %s24, 0
      %p86 = por %p84, %p85
      %p87 = scmp.ne.s32.totalorder %s76, %s79
      %p88 = scmp.eq.s32.totalorder %s29, 1
      %p89 = por %p87, %p88
      %p90 = scmp.ne.s32.totalorder %s79, %s80
      %p91 = scmp.eq.s32.totalorder %s29, 0
      %p92 = por %p90, %p91
      %p93 = scmp.ne.s32.totalorder %s79, %s80
      %p94 = scmp.eq.s32.totalorder %s30, 1
      %p95 = por %p93, %p94
      %p97 = scmp.ne.s32.totalorder %s80, %s96
      %p98 = scmp.eq.s32.totalorder %s30, 0
      %p99 = por %p97, %p98
      %s100 = sadd.s32 %s31, %s32
      %s101 = sadd.s32 %s43, %s39
      %s102 = ssub.s32 %s100, %s101
      %p103 = scmp.eq.s32.totalorder %s102, 0
      %s105 = sadd.s32 %s104, 1
      %s106 = scalar_select %p103, %s104, %s105
      %p109 = pneg %p103
      %p110 = scmp.eq.s32.totalorder %s24, 1
      %p111 = por %p109, %p110
      %p112 = scmp.ne.s32.totalorder %s104, %s107
      %p113 = scmp.eq.s32.totalorder %s24, 0
      %p114 = por %p112, %p113
      %p115 = scmp.ne.s32.totalorder %s104, %s107
      %p116 = scmp.eq.s32.totalorder %s29, 1
      %p117 = por %p115, %p116
      %p118 = scmp.ne.s32.totalorder %s107, %s108
      %p119 = scmp.eq.s32.totalorder %s29, 0
      %p120 = por %p118, %p119
      %p121 = scmp.ne.s32.totalorder %s107, %s108
      %p122 = scmp.eq.s32.totalorder %s30, 1
      %p123 = por %p121, %p122
      %p125 = scmp.ne.s32.totalorder %s108, %s124
      %p126 = scmp.eq.s32.totalorder %s30, 0
      %p127 = por %p125, %p126
      %s128 = sadd.s32 %s31, %s32
      %s129 = sadd.s32 %s43, %s39
      %s130 = ssub.s32 %s128, %s129
      %p131 = scmp.eq.s32.totalorder %s130, 0
      %s133 = sadd.s32 %s132, 1
      %s134 = scalar_select %p131, %s132, %s133
      %p137 = pneg %p131
      %p138 = scmp.eq.s32.totalorder %s24, 1
      %p139 = por %p137, %p138
      %p140 = scmp.ne.s32.totalorder %s132, %s135
      %p141 = scmp.eq.s32.totalorder %s24, 0
      %p142 = por %p140, %p141
      %p143 = scmp.ne.s32.totalorder %s132, %s135
      %p144 = scmp.eq.s32.totalorder %s29, 1
      %p145 = por %p143, %p144
      %p146 = scmp.ne.s32.totalorder %s135, %s136
      %p147 = scmp.eq.s32.totalorder %s29, 0
      %p148 = por %p146, %p147
      %p149 = scmp.ne.s32.totalorder %s135, %s136
      %p150 = scmp.eq.s32.totalorder %s30, 1
      %p151 = por %p149, %p150
      %p153 = scmp.ne.s32.totalorder %s136, %s152
      %p154 = scmp.eq.s32.totalorder %s30, 0
      %p155 = por %p153, %p154
      %s156 = sadd.s32 %s31, %s32
      %s157 = sadd.s32 %s43, %s39
      %s158 = ssub.s32 %s156, %s157
      %p159 = scmp.eq.s32.totalorder %s158, 0
      %s161 = sadd.s32 %s160, 1
      %s162 = scalar_select %p159, %s160, %s161
      %p165 = pneg %p159
      %p166 = scmp.eq.s32.totalorder %s24, 1
      %p167 = por %p165, %p166
      %p168 = scmp.ne.s32.totalorder %s160, %s163
      %p169 = scmp.eq.s32.totalorder %s24, 0
      %p170 = por %p168, %p169
      %p171 = scmp.ne.s32.totalorder %s160, %s163
      %p172 = scmp.eq.s32.totalorder %s29, 1
      %p173 = por %p171, %p172
      %p174 = scmp.ne.s32.totalorder %s163, %s164
      %p175 = scmp.eq.s32.totalorder %s29, 0
      %p176 = por %p174, %p175
      %p177 = scmp.ne.s32.totalorder %s163, %s164
      %p178 = scmp.eq.s32.totalorder %s30, 1
      %p179 = por %p177, %p178
      %p181 = scmp.ne.s32.totalorder %s164, %s180
      %p182 = scmp.eq.s32.totalorder %s30, 0
      %p183 = por %p181, %p182
      %s184 = sadd.s32 %s31, %s32
      %s185 = sadd.s32 %s43, %s39
      %s186 = ssub.s32 %s184, %s185
      %p187 = scmp.eq.s32.totalorder %s186, 0
      %s189 = sadd.s32 %s188, 1
      %s190 = scalar_select %p187, %s188, %s189
      %p193 = pneg %p187
      %p194 = scmp.eq.s32.totalorder %s24, 1
      %p195 = por %p193, %p194
      %p196 = scmp.ne.s32.totalorder %s188, %s191
      %p197 = scmp.eq.s32.totalorder %s24, 0
      %p198 = por %p196, %p197
      %p199 = scmp.ne.s32.totalorder %s188, %s191
      %p200 = scmp.eq.s32.totalorder %s29, 1
      %p201 = por %p199, %p200
      %p202 = scmp.ne.s32.totalorder %s191, %s192
      %p203 = scmp.eq.s32.totalorder %s29, 0
      %p204 = por %p202, %p203
      %p205 = scmp.ne.s32.totalorder %s191, %s192
      %p206 = scmp.eq.s32.totalorder %s30, 1
      %p207 = por %p205, %p206
      %p209 = scmp.ne.s32.totalorder %s192, %s208
      %p210 = scmp.eq.s32.totalorder %s30, 0
      %p211 = por %p209, %p210
      %s212 = ssub.s32 %s31, %s43
      %p213 = scmp.eq.s32.totalorder %s212, 0
      %s215 = sadd.s32 %s214, 1
      %s216 = scalar_select %p213, %s214, %s215
      %p219 = pneg %p213
      %p220 = scmp.eq.s32.totalorder %s24, 1
      %p221 = por %p219, %p220
      %p222 = scmp.ne.s32.totalorder %s214, %s217
      %p223 = scmp.eq.s32.totalorder %s24, 0
      %p224 = por %p222, %p223
      %p225 = scmp.ne.s32.totalorder %s214, %s217
      %p226 = scmp.eq.s32.totalorder %s29, 1
      %p227 = por %p225, %p226
      %p228 = scmp.ne.s32.totalorder %s217, %s218
      %p229 = scmp.eq.s32.totalorder %s29, 0
      %p230 = por %p228, %p229
      %p231 = scmp.ne.s32.totalorder %s217, %s218
      %p232 = scmp.eq.s32.totalorder %s30, 1
      %p233 = por %p231, %p232
      %p235 = scmp.ne.s32.totalorder %s218, %s234
      %p236 = scmp.eq.s32.totalorder %s30, 0
      %p237 = por %p235, %p236
      %p238 = scmp.le.s32.totalorder 1, %s24
      %p239 = scmp.lt.s32.totalorder %s24, 3
      %p240 = pnand %p238, %p239
      %p241 = pneg %p240
      // Predicated region
      $region9: #{tpu_custom_call.1} parent=5 // pred_check
        _
      $region10: #{tpu_custom_call.1} parent=5 // pred_check_branch
        %243 = sbr.rel (%p240) target = $region12
      $region11: #{tpu_custom_call.1} parent=5 // pred_region
        %s244 = ssub.s32 %s24, 1
      $region12: #{tpu_custom_call.1} parent=5 // pred_fallthru
        _
      %p245 = scmp.lt.s32.totalorder %s24, 2
      // Predicated region
      $region13: #{tpu_custom_call.1} parent=5 // pred_check
        %p246 = pneg %p245
      $region14: #{tpu_custom_call.1} parent=5 // pred_check_branch
        %248 = sbr.rel (%p246) target = $region16
      $region15: #{tpu_custom_call.1} parent=5 // pred_region
        // Predicated region
        $region17: #{tpu_custom_call.1} parent=15 // pred_check
          %p249 = pneg %p58
        $region18: #{tpu_custom_call.1} parent=15 // pred_check_branch
          %251 = sbr.rel (%p249) target = $region20
        $region19: #{tpu_custom_call.1} parent=15 // pred_region
          %s252 = sand.u32 %s48, 1
          %s253 = scalar_lea.sflag [#allocation5], %s252
          %s254 = sand.u32 %s48, 1
          %s255 = smul.addr %s254, 8
          %s256 = scalar_lea.vmem [#allocation4], %s255
          %s257 = sadd.s32 %s31, %s32
          %s259 = ssub.s32 128, 128
          %260 = vsyncadd %s253, %s259
          %s261 = smul.addr %s257, 128
          %s262 = scalar_lea.hbm %s0, %s261
          %s264 = sshll.u32 %s256, 4
          %s265 = int_to_ptr.vmem [resolvable:$true] %s264
          %267 = dma.hbm_to_vmem [thread:$0]  %s262, 128, %s265, %s253
        $region20: #{tpu_custom_call.1} parent=15 // pred_fallthru
          _
        // Predicated region
        $region21: #{tpu_custom_call.1} parent=15 // pred_check
          %p268 = pneg %p86
        $region22: #{tpu_custom_call.1} parent=15 // pred_check_branch
          %270 = sbr.rel (%p268) target = $region24
        $region23: #{tpu_custom_call.1} parent=15 // pred_region
          %s271 = sand.u32 %s24, 1
          %s272 = scalar_lea.sflag [#allocation8], %s271
          %s273 = sand.u32 %s76, 1
          %s274 = smul.addr %s273, 8
          %s275 = scalar_lea.vmem [#allocation7], %s274
          %s276 = sadd.s32 %s31, %s32
          %s278 = ssub.s32 128, 128
          %279 = vsyncadd %s272, %s278
          %s280 = smul.addr %s276, 128
          %s281 = scalar_lea.hbm %s1, %s280
          %s283 = sshll.u32 %s275, 4
          %s284 = int_to_ptr.vmem [resolvable:$true] %s283
          %286 = dma.hbm_to_vmem [thread:$0]  %s281, 128, %s284, %s272
        $region24: #{tpu_custom_call.1} parent=15 // pred_fallthru
          _
        // Predicated region
        $region25: #{tpu_custom_call.1} parent=15 // pred_check
          %p287 = pneg %p114
        $region26: #{tpu_custom_call.1} parent=15 // pred_check_branch
          %289 = sbr.rel (%p287) target = $region28
        $region27: #{tpu_custom_call.1} parent=15 // pred_region
          %s290 = sand.u32 %s24, 1
          %s291 = scalar_lea.sflag [#allocation8], %s290
          %s292 = sand.u32 %s104, 1
          %s293 = smul.addr %s292, 8
          %s294 = scalar_lea.vmem [#allocation9], %s293
          %s295 = sadd.s32 %s31, %s32
          %s297 = ssub.s32 128, 128
          %298 = vsyncadd %s291, %s297
          %s299 = smul.addr %s295, 128
          %s300 = scalar_lea.hbm %s2, %s299
          %s302 = sshll.u32 %s294, 4
          %s303 = int_to_ptr.vmem [resolvable:$true] %s302
          %305 = dma.hbm_to_vmem [thread:$0]  %s300, 128, %s303, %s291
        $region28: #{tpu_custom_call.1} parent=15 // pred_fallthru
          _
        // Predicated region
        $region29: #{tpu_custom_call.1} parent=15 // pred_check
          %p306 = pneg %p142
        $region30: #{tpu_custom_call.1} parent=15 // pred_check_branch
          %308 = sbr.rel (%p306) target = $region32
        $region31: #{tpu_custom_call.1} parent=15 // pred_region
          %s309 = sand.u32 %s24, 1
          %s310 = scalar_lea.sflag [#allocation11], %s309
          %s311 = sand.u32 %s132, 1
          %s312 = smul.addr %s311, 8
          %s313 = scalar_lea.vmem [#allocation10], %s312
          %s314 = sadd.s32 %s31, %s32
          %s316 = ssub.s32 128, 128
          %317 = vsyncadd %s310, %s316
          %s318 = smul.addr %s314, 128
          %s319 = scalar_lea.hbm %s3, %s318
          %s321 = sshll.u32 %s313, 4
          %s322 = int_to_ptr.vmem [resolvable:$true] %s321
          %324 = dma.hbm_to_vmem [thread:$0]  %s319, 128, %s322, %s310
        $region32: #{tpu_custom_call.1} parent=15 // pred_fallthru
          _
        // Predicated region
        $region33: #{tpu_custom_call.1} parent=15 // pred_check
          %p325 = pneg %p170
        $region34: #{tpu_custom_call.1} parent=15 // pred_check_branch
          %327 = sbr.rel (%p325) target = $region36
        $region35: #{tpu_custom_call.1} parent=15 // pred_region
          %s328 = sand.u32 %s24, 1
          %s329 = scalar_lea.sflag [#allocation11], %s328
          %s330 = sand.u32 %s160, 1
          %s331 = smul.addr %s330, 8
          %s332 = scalar_lea.vmem [#allocation12], %s331
          %s333 = sadd.s32 %s31, %s32
          %s335 = ssub.s32 128, 128
          %336 = vsyncadd %s329, %s335
          %s337 = smul.addr %s333, 128
          %s338 = scalar_lea.hbm %s4, %s337
          %s340 = sshll.u32 %s332, 4
          %s341 = int_to_ptr.vmem [resolvable:$true] %s340
          %343 = dma.hbm_to_vmem [thread:$0]  %s338, 128, %s341, %s329
        $region36: #{tpu_custom_call.1} parent=15 // pred_fallthru
          _
        // Predicated region
        $region37: #{tpu_custom_call.1} parent=15 // pred_check
          %p344 = pneg %p198
        $region38: #{tpu_custom_call.1} parent=15 // pred_check_branch
          %346 = sbr.rel (%p344) target = $region40
        $region39: #{tpu_custom_call.1} parent=15 // pred_region
          %s347 = sadd.s32 %s31, %s32
          %p348 = scmp.lt.s32.totalorder %s347, 1
          %s349 = scalar_select %p348, %s347, 1
          %s350 = smul.addr %s349, 8
          %s351 = scalar_lea.vmem %s5, %s350
          %s352 = sadd.s32 %s31, %s32
        $region40: #{tpu_custom_call.1} parent=15 // pred_fallthru
          _
      $region16: #{tpu_custom_call.1} parent=5 // pred_fallthru
        _
      %p353 = scmp.le.s32.totalorder 1, %s24
      %p354 = scmp.lt.s32.totalorder %s24, 3
      %p355 = pnand %p353, %p354
      %p356 = pneg %p355
      // Predicated region
      $region41: #{tpu_custom_call.1} parent=5 // pred_check
        _
      $region42: #{tpu_custom_call.1} parent=5 // pred_check_branch
        %358 = sbr.rel (%p355) target = $region44
      $region43: #{tpu_custom_call.1} parent=5 // pred_region
        %s359 = ssub.s32 %s24, 1
        %s360 = sand.u32 %s51, 1
        %s361 = scalar_lea.sflag [#allocation5], %s360
        %s362 = sand.u32 %s51, 1
        %s363 = smul.addr %s362, 8
        %s364 = scalar_lea.vmem [#allocation4], %s363
        // Predicated region
        $region45: #{tpu_custom_call.1} parent=43 // pred_check
          %p365 = pneg %p64
        $region46: #{tpu_custom_call.1} parent=43 // pred_check_branch
          %367 = sbr.rel (%p365) target = $region48
        $region47: #{tpu_custom_call.1} parent=43 // pred_region
          %368 = dma.done %s361, 128
        $region48: #{tpu_custom_call.1} parent=43 // pred_fallthru
          _
        %s369 = sand.u32 %s29, 1
        %s370 = scalar_lea.sflag [#allocation8], %s369
        %s371 = sand.u32 %s79, 1
        %s372 = smul.addr %s371, 8
        %s373 = scalar_lea.vmem [#allocation7], %s372
        // Predicated region
        $region49: #{tpu_custom_call.1} parent=43 // pred_check
          %p374 = pneg %p92
        $region50: #{tpu_custom_call.1} parent=43 // pred_check_branch
          %376 = sbr.rel (%p374) target = $region52
        $region51: #{tpu_custom_call.1} parent=43 // pred_region
          %377 = dma.done %s370, 128
        $region52: #{tpu_custom_call.1} parent=43 // pred_fallthru
          _
        %s378 = sand.u32 %s29, 1
        %s379 = scalar_lea.sflag [#allocation8], %s378
        %s380 = sand.u32 %s107, 1
        %s381 = smul.addr %s380, 8
        %s382 = scalar_lea.vmem [#allocation9], %s381
        // Predicated region
        $region53: #{tpu_custom_call.1} parent=43 // pred_check
          %p383 = pneg %p120
        $region54: #{tpu_custom_call.1} parent=43 // pred_check_branch
          %385 = sbr.rel (%p383) target = $region56
        $region55: #{tpu_custom_call.1} parent=43 // pred_region
          %386 = dma.done %s379, 128
        $region56: #{tpu_custom_call.1} parent=43 // pred_fallthru
          _
        %s387 = sand.u32 %s29, 1
        %s388 = scalar_lea.sflag [#allocation11], %s387
        %s389 = sand.u32 %s135, 1
        %s390 = smul.addr %s389, 8
        %s391 = scalar_lea.vmem [#allocation10], %s390
        // Predicated region
        $region57: #{tpu_custom_call.1} parent=43 // pred_check
          %p392 = pneg %p148
        $region58: #{tpu_custom_call.1} parent=43 // pred_check_branch
          %394 = sbr.rel (%p392) target = $region60
        $region59: #{tpu_custom_call.1} parent=43 // pred_region
          %395 = dma.done %s388, 128
        $region60: #{tpu_custom_call.1} parent=43 // pred_fallthru
          _
        %s396 = sand.u32 %s29, 1
        %s397 = scalar_lea.sflag [#allocation11], %s396
        %s398 = sand.u32 %s163, 1
        %s399 = smul.addr %s398, 8
        %s400 = scalar_lea.vmem [#allocation12], %s399
        // Predicated region
        $region61: #{tpu_custom_call.1} parent=43 // pred_check
          %p401 = pneg %p176
        $region62: #{tpu_custom_call.1} parent=43 // pred_check_branch
          %403 = sbr.rel (%p401) target = $region64
        $region63: #{tpu_custom_call.1} parent=43 // pred_region
          %404 = dma.done %s397, 128
        $region64: #{tpu_custom_call.1} parent=43 // pred_fallthru
          _
        %s405 = sand.u32 %s51, 1
        %s406 = scalar_lea.sflag [#allocation5], %s405
        %s407 = sand.u32 %s51, 1
        %s408 = smul.addr %s407, 8
        %s409 = scalar_lea.vmem [#allocation4], %s408
        %p410 = pneg %p64
        %p411 = pneg %p61
        %s412 = sand.u32 %s29, 1
        %s413 = scalar_lea.sflag [#allocation8], %s412
        %s414 = sand.u32 %s79, 1
        %s415 = smul.addr %s414, 8
        %s416 = scalar_lea.vmem [#allocation7], %s415
        %p417 = pneg %p92
        %p418 = pneg %p89
        %s419 = sand.u32 %s29, 1
        %s420 = scalar_lea.sflag [#allocation8], %s419
        %s421 = sand.u32 %s107, 1
        %s422 = smul.addr %s421, 8
        %s423 = scalar_lea.vmem [#allocation9], %s422
        %p424 = pneg %p120
        %p425 = pneg %p117
        %s426 = sand.u32 %s29, 1
        %s427 = scalar_lea.sflag [#allocation11], %s426
        %s428 = sand.u32 %s135, 1
        %s429 = smul.addr %s428, 8
        %s430 = scalar_lea.vmem [#allocation10], %s429
        %p431 = pneg %p148
        %p432 = pneg %p145
        %s433 = sand.u32 %s29, 1
        %s434 = scalar_lea.sflag [#allocation11], %s433
        %s435 = sand.u32 %s163, 1
        %s436 = smul.addr %s435, 8
        %s437 = scalar_lea.vmem [#allocation12], %s436
        %p438 = pneg %p176
        %p439 = pneg %p173
        %s440 = sadd.s32 %s33, %s34
        %p441 = scmp.lt.s32.totalorder %s440, 1
        %s442 = scalar_select %p441, %s440, 1
        %s443 = smul.addr %s442, 8
        %s444 = scalar_lea.vmem %s5, %s443
        %p445 = pneg %p204
        %p446 = pneg %p201
        %p447 = pneg %p230
        %p448 = pneg %p227
        %s449 = sand.u32 %s217, 1
        %s450 = scalar_lea.sflag [#allocation6], %s449
        %s451 = sand.u32 %s217, 1
        %s452 = smul.addr %s451, 8
        %s453 = scalar_lea.vmem [#allocation13], %s452
        %s454 = sadd.s32 %s33, %s34
        %s455 = sadd.s32 %s33, %s34
        %s456 = sadd.s32 %s33, %s34
        %s457 = sadd.s32 %s33, %s34
        %s458 = sadd.s32 %s33, %s34
        %s459 = sadd.s32 %s33, %s34
        %p460 = scmp.lt.s32.totalorder %s459, 1
        %s461 = scalar_select %p460, %s459, 1
        %s462 = smul.addr %s461, 8
        %s463 = scalar_lea.vmem %s5, %s462
        %s464 = sadd.s32 %s33, %s34
        %p465 = scmp.eq.s32.totalorder %s34, 0
        // Predicated region
        $region65: #{tpu_custom_call.1} parent=43 // pred_check
          %p466 = pneg %p465
        $region66: #{tpu_custom_call.1} parent=43 // pred_check_branch
          %468 = sbr.rel (%p466) target = $region68
        $region67: #{tpu_custom_call.1} parent=43 // pred_region
          %469 = vst [vmem:[#allocation2] sm:$0xff] 0.0
          %470 = vst [vmem:[#allocation3] sm:$0xff] 0.0
        $region68: #{tpu_custom_call.1} parent=43 // pred_fallthru
          _
        %v471 = vld [vmem:[%s364] sm:$0xff]
        %v472 = vld [vmem:[%s373] sm:$0xff]
        %v473 = vlog2.pop %v472
        %v474 = vmul.f32 %v473, 0.6931472
        %v475 = vmul.f32 %v471, %v474
        %v476 = vsub.f32 %v472, %v475
        %v477 = vld [vmem:[#allocation2] sm:$0xff]
        %v478 = vadd.f32 %v476, 0.0
        %v479 = vadd.f32 %v477, %v478
        %480 = vst [vmem:[#allocation2] sm:$0xff] %v479
        %v481 = vld [vmem:[%s382] sm:$0xff]
        %v482 = vld [vmem:[%s391] sm:$0xff]
        %v483 = vld [vmem:[%s400] sm:$0xff]
        %v484 = vld [vmem:[%s463] sm:$0xff]
        %v485 = vsub.f32 0.0, %v484
        %v486 = vmul.f32 %v485, 1.442695
        %v487 = vpow.pop %v486
        %v488 = vsub.f32 %v481, %v483
        %v489 = vmul.f32 %v488, %v488
        %v490 = vadd.f32 %v482, 1.0
        %v491 = vsub.f32 %v490, %v484
        %v492 = vmul.f32 %v482, 1.442695
        %v493 = vpow.pop %v492
        %v494 = vadd.f32 %v489, %v493
        %v495 = vmul.f32 %v494, %v487
        %v496 = vsub.f32 %v491, %v495
        %v497 = vld [vmem:[#allocation3] sm:$0xff]
        %v498 = vadd.f32 %v496, 0.0
        %v499 = vadd.f32 %v497, %v498
        %500 = vst [vmem:[#allocation3] sm:$0xff] %v499
        // Predicated region
        $region69: #{tpu_custom_call.1} parent=43 // pred_check
          %p501 = pneg %p465
        $region70: #{tpu_custom_call.1} parent=43 // pred_check_branch
          %503 = sbr.rel (%p501) target = $region72
        $region71: #{tpu_custom_call.1} parent=43 // pred_region
          %v504 = vld [vmem:[#allocation2] sm:$0xff]
          %505 = vadd.xlane.f32.xlu0 %v504
          %v506 = vpop.xlane.xlu0 %505
          %v507 = vrot.slane %v506, 4
          %v508 = vadd.f32 %v506, %v507
          %v509 = vrot.slane %v508, 2
          %v510 = vadd.f32 %v508, %v509
          %v511 = vrot.slane %v510, 1
          %v512 = vadd.f32 %v510, %v511
          %s513 = vtos %v512
          %v514 = vld [vmem:[#allocation3] sm:$0xff]
          %515 = vadd.xlane.f32.xlu0 %v514
          %v516 = vpop.xlane.xlu0 %515
          %v517 = vrot.slane %v516, 4
          %v518 = vadd.f32 %v516, %v517
          %v519 = vrot.slane %v518, 2
          %v520 = vadd.f32 %v518, %v519
          %v521 = vrot.slane %v520, 1
          %v522 = vadd.f32 %v520, %v521
          %s523 = vtos %v522
          %s524 = smul.f32 %s523, 0.5
          %s525 = ssub.f32 %s513, %s524
          %v526 = vstv %s525
          %527 = vst [vmem:[%s453] sm:$0xff] %v526
        $region72: #{tpu_custom_call.1} parent=43 // pred_fallthru
          _
        %s528 = sand.u32 %s217, 1
        %s529 = scalar_lea.sflag [#allocation6], %s528
        %s530 = sand.u32 %s217, 1
        %s531 = smul.addr %s530, 8
        %s532 = scalar_lea.vmem [#allocation13], %s531
        // Predicated region
        $region73: #{tpu_custom_call.1} parent=43 // pred_check
          %p533 = pneg %p227
        $region74: #{tpu_custom_call.1} parent=43 // pred_check_branch
          %535 = sbr.rel (%p533) target = $region76
        $region75: #{tpu_custom_call.1} parent=43 // pred_region
          %s537 = ssub.s32 128, 128
          %538 = vsyncadd %s529, %s537
          %s539 = smul.addr %s33, 128
          %s540 = scalar_lea.hbm %s6, %s539
          %s542 = sshll.u32 %s532, 4
          %s543 = int_to_ptr.vmem [resolvable:$true] %s542
          %545 = dma.vmem_to_hbm [thread:$0]  %s543, 128, %s540, %s529
        $region76: #{tpu_custom_call.1} parent=43 // pred_fallthru
          _
      $region44: #{tpu_custom_call.1} parent=5 // pred_fallthru
        _
      %p546 = scmp.le.s32.totalorder 2, %s24
      // Predicated region
      $region77: #{tpu_custom_call.1} parent=5 // pred_check
        %p547 = pneg %p546
      $region78: #{tpu_custom_call.1} parent=5 // pred_check_branch
        %549 = sbr.rel (%p547) target = $region80
      $region79: #{tpu_custom_call.1} parent=5 // pred_region
        %s550 = ssub.s32 %s24, 2
        // Predicated region
        $region81: #{tpu_custom_call.1} parent=79 // pred_check
          %p551 = pneg %p233
        $region82: #{tpu_custom_call.1} parent=79 // pred_check_branch
          %553 = sbr.rel (%p551) target = $region84
        $region83: #{tpu_custom_call.1} parent=79 // pred_region
          %s554 = sand.u32 %s218, 1
          %s555 = scalar_lea.sflag [#allocation6], %s554
          %s556 = sand.u32 %s218, 1
          %s557 = smul.addr %s556, 8
          %s558 = scalar_lea.vmem [#allocation13], %s557
          %559 = dma.done %s555, 128
        $region84: #{tpu_custom_call.1} parent=79 // pred_fallthru
          _
      $region80: #{tpu_custom_call.1} parent=5 // pred_fallthru
        _
    $region6: #{tpu_custom_call.1} parent=1 // loop_footer
      %s28 = sadd.s32 1, %s24
    $region7: #{tpu_custom_call.1} parent=1 // loop_footer_branch
      %23 = sbr.rel target = $region3
    $region8: #{tpu_custom_call.1} parent=1 // loop_exit
      _
    %560 = vsyncpa [#allocation5], 1
    %s561 = scalar_lea.sflag [#allocation5], 1
    %562 = vsyncpa %s561, 1
    %563 = vsyncpa [#allocation8], 1
    %s564 = scalar_lea.sflag [#allocation8], 1
    %565 = vsyncpa %s564, 1
    %566 = vsyncpa [#allocation11], 1
    %s567 = scalar_lea.sflag [#allocation11], 1
    %568 = vsyncpa %s567, 1
    %569 = vsyncpa [#allocation6], 1
    %s570 = scalar_lea.sflag [#allocation6], 1
    %571 = vsyncpa %s570, 1

</llo_original>
